<compile_context>
chip_gen: v6e
topology: v6e:2x2x1
jax: 0.10.0
libtpu: 0.0.40
codegen_flags: <defaults>
</compile_context>

<pallas_src>
import functools

import jax
import jax.numpy as jnp
from jax.experimental import pallas as pl
from jax.experimental.pallas import tpu as pltpu


def _round_up(v, m):
    return ((v + m - 1) // m) * m


def _mlp_fused_kernel(x_ref, w_ref, b_ref, o_ref, *, layer_specs):
    """Fused layer1 -> tanh -> ... -> layerN; all operands VMEM resident.

    x_ref : [B, in0]             f32
    w_ref : [sum(in_i_pad), W]   bf16 (packed, pre-transposed W^T blocks)
    b_ref : [L * B_pad, W]       f32  (packed, pre-broadcast biases)
    o_ref : [B, out_last]        f32
    layer_specs: static tuple of (w_row_off, in_i, b_row_off, out_i)
    """
    n_layers = len(layer_specs)
    x = x_ref[...]                                        # f32 activations
    bsz = x.shape[0]
    for i, (woff, in_i, boff, out_i) in enumerate(layer_specs):
        w = w_ref[woff:woff + in_i, 0:out_i]              # bf16 [in_i, out_i]
        b = b_ref[boff:boff + bsz, 0:out_i]               # f32  [B, out_i]
        # bf16 x bf16 -> f32 accumulate on the MXU; bias add + tanh stay f32.
        x = jnp.dot(x.astype(jnp.bfloat16), w,
                    preferred_element_type=jnp.float32) + b
        if i < n_layers - 1:
            x = jnp.tanh(x)                               # EUP, f32
    o_ref[...] = x.astype(o_ref.dtype)


@functools.partial(jax.jit, static_argnames=("layer_specs", "out_dim"))
def policy_model_forward(x, w_slab, b_slab, *, layer_specs, out_dim):
    """Fused Pallas equivalent of PolicyModel.forward (logits only)."""
    bsz = x.shape[0]
    vmem = pl.BlockSpec(memory_space=pltpu.MemorySpace.VMEM)
    kernel = functools.partial(_mlp_fused_kernel, layer_specs=layer_specs)

    # TODO(synk): if batch ever grows to a few hundred+ rows, add a grid over
    # the batch axis only (grid=(pl.cdiv(B, bm),), x/o index_map -> (i, 0),
    # slab index_maps -> (0, 0) so the ~13 KB of params stays VMEM-resident,
    # dimension_semantics=("parallel",) so v7x's 2 TensorCores split the
    # batch) and size bm against v7x's 64 MiB physical / 32 MiB scoped VMEM,
    # not the 128 MiB of v5e/v6e.  Pointless at batch=8.
    return pl.pallas_call(
        kernel,
        out_shape=jax.ShapeDtypeStruct((bsz, out_dim), jnp.float32),
        in_specs=[vmem, vmem, vmem],
        out_specs=vmem,
    )(x, w_slab, b_slab)


def init_params(neurons, key):
    """Deterministic init matching nn.Linear shapes: W [out, in], b [out]."""
    params = []
    for i in range(len(neurons) - 1):
        key, kw, kb = jax.random.split(key, 3)
        fan_in = neurons[i]
        bound = 1.0 / jnp.sqrt(fan_in)
        w = jax.random.uniform(
            kw, (neurons[i + 1], neurons[i]), jnp.float32, -bound, bound
        )
        b = jax.random.uniform(
            kb, (neurons[i + 1],), jnp.float32, -bound, bound
        )
        params.append((w, b))
    return params


def prepare_params(torch_params, batch):
    """One-time layout prep (outside the hot path).

      * W [out,in] -> W^T [in,out], cast bf16, packed row-wise into one slab
        (row offsets rounded to 16 so bf16 sublane packing stays aligned).
      * b [out] -> broadcast to [batch,out] f32, packed row-wise into one slab
        (row blocks rounded to 8 for tile-aligned static slices).

    Returns (w_slab, b_slab, layer_specs, out_dim); layer_specs is a static
    tuple of (w_row_off, in_i, b_row_off, out_i) consumed inside the kernel.
    """
    slab_w = max(w.shape[0] for w, _ in torch_params)      # widest 'out' dim
    b_rows = _round_up(batch, 8)

    layer_specs = []
    w_blocks, b_blocks = [], []
    w_off = 0
    for i, (w, b) in enumerate(torch_params):
        out_i, in_i = w.shape
        in_pad = _round_up(in_i, 16)                       # bf16 sublane pairs

        w_blk = jnp.zeros((in_pad, slab_w), jnp.bfloat16)
        w_blk = w_blk.at[:in_i, :out_i].set(jnp.transpose(w).astype(jnp.bfloat16))
        w_blocks.append(w_blk)

        b_blk = jnp.zeros((b_rows, slab_w), jnp.float32)
        b_blk = b_blk.at[:batch, :out_i].set(jnp.broadcast_to(b, (batch, out_i)))
        b_blocks.append(b_blk)

        layer_specs.append((w_off, in_i, i * b_rows, out_i))
        w_off += in_pad

    w_slab = jnp.concatenate(w_blocks, axis=0)
    b_slab = jnp.concatenate(b_blocks, axis=0)
    out_dim = torch_params[-1][0].shape[0]
    return w_slab, b_slab, tuple(layer_specs), out_dim


if __name__ == "__main__":
    # Small MLP consistent with PolicyModel(neurons, activation=torch.tanh):
    # obs_dim=32 -> hidden 64, 64 -> 4 action logits.
    neurons = [32, 64, 64, 4]
    batch = 8

    key = jax.random.PRNGKey(0)
    key, k_obs = jax.random.split(key)
    torch_params = init_params(neurons, key)               # PyTorch layout (W [out,in])
    w_slab, b_slab, layer_specs, out_dim = prepare_params(torch_params, batch)

    obs = jax.random.normal(k_obs, (batch, neurons[0]), dtype=jnp.float32)

    logits = policy_model_forward(obs, w_slab, b_slab,
                                  layer_specs=layer_specs, out_dim=out_dim)
    logits = jax.block_until_ready(logits)

    # Pure-JAX f32 reference (PyTorch semantics: x @ W.T + b, tanh between
    # layers).  Kernel uses bf16 MXU operands with f32 accumulation, so the
    # tolerance is loosened accordingly.
    ref = obs
    for num, (w, b) in enumerate(torch_params):
        ref = ref @ w.T + b
        if num < len(torch_params) - 1:
            ref = jnp.tanh(ref)

    assert logits.shape == (batch, neurons[-1])
    max_err = jnp.max(jnp.abs(logits - ref))
    assert jnp.allclose(logits, ref, atol=3e-2, rtol=3e-2), f"max abs err {max_err}"

    print("KERNEL_OK")
</pallas_src>

<mosaic_0001>
module attributes {stable_mosaic.version = 11 : i64} {
  func.func @_mlp_fused_kernel(%arg0: memref<8x32xf32, #tpu.memory_space<vmem>>, %arg1: memref<160x64xbf16, #tpu.memory_space<vmem>>, %arg2: memref<24x64xf32, #tpu.memory_space<vmem>>, %arg3: memref<8x4xf32, #tpu.memory_space<vmem>>) attributes {dimension_semantics = [], scalar_prefetch = 0 : i64, scratch_operands = 0 : i64, tpu.core_type = #tpu.core_type<tc>} {
    %c0 = arith.constant 0 : index
    %c0_0 = arith.constant 0 : index
    %0 = vector.load %arg0[%c0, %c0_0] : memref<8x32xf32, #tpu.memory_space<vmem>>, vector<8x32xf32>
    %c0_1 = arith.constant 0 : index
    %c0_2 = arith.constant 0 : index
    %1 = vector.load %arg1[%c0_1, %c0_2] : memref<160x64xbf16, #tpu.memory_space<vmem>>, vector<32x64xbf16>
    %c0_3 = arith.constant 0 : index
    %c0_4 = arith.constant 0 : index
    %2 = vector.load %arg2[%c0_3, %c0_4] : memref<24x64xf32, #tpu.memory_space<vmem>>, vector<8x64xf32>
    %3 = arith.truncf %0 : vector<8x32xf32> to vector<8x32xbf16>
    %cst = arith.constant dense<0.000000e+00> : vector<8x64xf32>
    %4 = tpu.matmul %3, %1, %cst {dimension_numbers = #tpu.dot_dimension_numbers<[1], [0], [0], [1], [0, 0, 1, 1], [], []>} : vector<8x32xbf16>, vector<32x64xbf16>, vector<8x64xf32> -> vector<8x64xf32>
    %5 = arith.addf %4, %2 : vector<8x64xf32>
    %6 = math.tanh %5 : vector<8x64xf32>
    %c32 = arith.constant 32 : index
    %c0_5 = arith.constant 0 : index
    %7 = vector.load %arg1[%c32, %c0_5] : memref<160x64xbf16, #tpu.memory_space<vmem>>, vector<64x64xbf16>
    %c8 = arith.constant 8 : index
    %c0_6 = arith.constant 0 : index
    %8 = vector.load %arg2[%c8, %c0_6] : memref<24x64xf32, #tpu.memory_space<vmem>>, vector<8x64xf32>
    %9 = arith.truncf %6 : vector<8x64xf32> to vector<8x64xbf16>
    %cst_7 = arith.constant dense<0.000000e+00> : vector<8x64xf32>
    %10 = tpu.matmul %9, %7, %cst_7 {dimension_numbers = #tpu.dot_dimension_numbers<[1], [0], [0], [1], [0, 0, 1, 1], [], []>} : vector<8x64xbf16>, vector<64x64xbf16>, vector<8x64xf32> -> vector<8x64xf32>
    %11 = arith.addf %10, %8 : vector<8x64xf32>
    %12 = math.tanh %11 : vector<8x64xf32>
    %c96 = arith.constant 96 : index
    %c0_8 = arith.constant 0 : index
    %13 = vector.load %arg1[%c96, %c0_8] : memref<160x64xbf16, #tpu.memory_space<vmem>>, vector<64x4xbf16>
    %c16 = arith.constant 16 : index
    %c0_9 = arith.constant 0 : index
    %14 = vector.load %arg2[%c16, %c0_9] : memref<24x64xf32, #tpu.memory_space<vmem>>, vector<8x4xf32>
    %15 = arith.truncf %12 : vector<8x64xf32> to vector<8x64xbf16>
    %cst_10 = arith.constant dense<0.000000e+00> : vector<8x4xf32>
    %16 = tpu.matmul %15, %13, %cst_10 {dimension_numbers = #tpu.dot_dimension_numbers<[1], [0], [0], [1], [0, 0, 1, 1], [], []>} : vector<8x64xbf16>, vector<64x4xbf16>, vector<8x4xf32> -> vector<8x4xf32>
    %17 = arith.addf %16, %14 : vector<8x4xf32>
    %c0_11 = arith.constant 0 : index
    %c0_12 = arith.constant 0 : index
    %18 = vector.load %arg3[%c0_11, %c0_12] : memref<8x4xf32, #tpu.memory_space<vmem>>, vector<8x4xf32>
    tpu.vector_store %arg3[%c0_11, %c0_12], %17 {strides = array<i32>} : memref<8x4xf32, #tpu.memory_space<vmem>>, vector<8x4xf32>,
    return
  }
}

</mosaic_0001>

<llo_original>
// kernel: policy_model_forward.1
$region0: #{policy_model_forward.1}
  #allocation0 [shape = 'u32[]', space=smem, size = 0x4, offset = 0x4, fixed_abs, tag = 'smem constant byte address 0x4 - core index']
  #allocation1 [shape = 'u32[144,128]{1,0:T(1,128)}', space=vmem, size = 0x12000, scoped, tag = 'internal scratch']
  %s0 = inlined_call_operand.vmem [shape: f32[8,32], index: 0, kind: input, shape index: {}]
  %s1 = inlined_call_operand.vmem [shape: bf16[160,64], index: 1, kind: input, shape index: {}]
  %s2 = inlined_call_operand.vmem [shape: f32[24,64], index: 2, kind: input, shape index: {}]
  %s3 = inlined_call_operand.vmem [shape: f32[8,4], index: 3, kind: output, shape index: {}]
  %s4 = sld [smem:[#allocation0]]
  $region22: #{policy_model_forward.1} parent=0
    _
  %s6 = ssub.s32 1, %s4
  %s7 = scalar_select 0, %s6, %s4
  // Predicated region
  $region2: #{policy_model_forward.1} parent=0 // pred_check
    _
  $region3: #{policy_model_forward.1} parent=0 // pred_check_branch
    %9 = sbr.rel (0) target = $region5
  $region4: #{policy_model_forward.1} parent=0 // pred_region
    _
  $region5: #{policy_model_forward.1} parent=0 // pred_fallthru
    _
  // Predicated region
  $region6: #{policy_model_forward.1} parent=0 // pred_check
    _
  $region7: #{policy_model_forward.1} parent=0 // pred_check_branch
    %11 = sbr.rel (0) target = $region9
  $region8: #{policy_model_forward.1} parent=0 // pred_region
    _
  $region9: #{policy_model_forward.1} parent=0 // pred_fallthru
    _
  // Predicated region
  $region10: #{policy_model_forward.1} parent=0 // pred_check
    _
  $region11: #{policy_model_forward.1} parent=0 // pred_check_branch
    %13 = sbr.rel (0) target = $region13
  $region12: #{policy_model_forward.1} parent=0 // pred_region
    _
  $region13: #{policy_model_forward.1} parent=0 // pred_fallthru
    _
  %v15 = vld [vmem:[%s0] sm:$0xff]
  %v16 = vld [vmem:[%s1] sm:$0xf]
  %v17 = vld [vmem:[%s1 + $0x4] sm:$0xf]
  %v18 = vld [vmem:[%s1 + $0x8] sm:$0xf]
  %v19 = vld [vmem:[%s1 + $0xc] sm:$0xf]
  %v20 = vld [vmem:[%s2] sm:$0xff]
  %v21 = vpack.c.bf16 %v15, %v15
  %v26 = vunpack.c.l.b16 %v16
  %v27 = vunpack.c.l.b16 %v17
  %v28 = vunpack.c.l.b16 %v18
  %v29 = vunpack.c.l.b16 %v19
  %v30 = vpack.c.b16 %v27, %v26
  %v31 = vpack.c.b16 %v29, %v28
  %vm34 = vcmask 261120
  %v36 = vsel %vm34, %v21, 0
  %38 = vmatprep.subr.bf16.mxu0 0
  %39 = vmatpush1.bf16.msra.mxu0 0
  %40 = vmatprep.subr.bf16.mxu0 0
  %41 = vmatpush1.bf16.msra.mxu0 0
  %42 = vmatprep.subr.bf16.mxu0 0
  %43 = vmatpush1.bf16.msra.mxu0 0
  %44 = vmatprep.subr.bf16.mxu0 0
  %45 = vmatpush1.bf16.msra.mxu0 0
  %46 = vmatprep.subr.bf16.mxu0 0
  %47 = vmatpush1.bf16.msra.mxu0 0
  %48 = vmatprep.subr.bf16.mxu0 0
  %49 = vmatpush1.bf16.msra.mxu0 0
  %50 = vmatprep.subr.bf16.mxu0 0
  %51 = vmatpush1.bf16.msra.mxu0 %v31
  %52 = vmatprep.subr.bf16.mxu0 0
  %53 = vmatpush1.bf16.msra.mxu0 %v30
  %54 = vmatprep.subr.bf16.mxu0 0
  %55 = vmatpush2.bf16.msra.mxu0 0
  %56 = vmatprep.subr.bf16.mxu0 0
  %57 = vmatpush2.bf16.msra.mxu0 0
  %58 = vmatprep.subr.bf16.mxu0 0
  %59 = vmatpush2.bf16.msra.mxu0 0
  %60 = vmatprep.subr.bf16.mxu0 0
  %61 = vmatpush2.bf16.msra.mxu0 0
  %62 = vmatprep.subr.bf16.mxu0 0
  %63 = vmatpush2.bf16.msra.mxu0 0
  %64 = vmatprep.subr.bf16.mxu0 0
  %65 = vmatpush2.bf16.msra.mxu0 0
  %66 = vmatprep.subr.bf16.mxu0 0
  %67 = vmatpush2.bf16.msra.mxu0 0
  %68 = vmatprep.subr.bf16.mxu0 0
  %69 = vmatpush2.bf16.msra.mxu0 0
  %70 = vmatprep.mubr.bf16.mxu0 0
  %71 = vmatmul.mubr.bf16.gmra.mxu0 %v36
  %v72 = vpop.f32.mrf.mxu0
  %v73 = vadd.f32 %v20, %v72
  %v74 = vpop.f32.mrf.mxu0
  %v75 = vpop.f32.mrf.mxu0
  %v76 = vpop.f32.mrf.mxu0
  %77 = vdwg.mxu0
  %v78 = vtanh.pop %v73
  %v79 = vld [vmem:[%s1 + $0x10] sm:$0xf]
  %v80 = vld [vmem:[%s1 + $0x14] sm:$0xf]
  %v81 = vld [vmem:[%s1 + $0x18] sm:$0xf]
  %v82 = vld [vmem:[%s1 + $0x1c] sm:$0xf]
  %v83 = vld [vmem:[%s1 + $0x20] sm:$0xf]
  %v84 = vld [vmem:[%s1 + $0x24] sm:$0xf]
  %v85 = vld [vmem:[%s1 + $0x28] sm:$0xf]
  %v86 = vld [vmem:[%s1 + $0x2c] sm:$0xf]
  %v87 = vld [vmem:[%s2 + $0x8] sm:$0xff]
  %v88 = vpack.c.bf16 %v78, %v78
  %v97 = vunpack.c.l.b16 %v79
  %v98 = vunpack.c.l.b16 %v80
  %v99 = vunpack.c.l.b16 %v81
  %v100 = vunpack.c.l.b16 %v82
  %v101 = vunpack.c.l.b16 %v83
  %v102 = vunpack.c.l.b16 %v84
  %v103 = vunpack.c.l.b16 %v85
  %v104 = vunpack.c.l.b16 %v86
  %v105 = vpack.c.b16 %v98, %v97
  %v106 = vpack.c.b16 %v100, %v99
  %v107 = vpack.c.b16 %v102, %v101
  %v108 = vpack.c.b16 %v104, %v103
  %vm113 = vcmask 523264
  %v115 = vsel %vm113, %v88, 0
  %117 = vmatprep.subr.bf16.mxu0 0
  %118 = vmatpush1.bf16.msra.mxu0 0
  %119 = vmatprep.subr.bf16.mxu0 0
  %120 = vmatpush1.bf16.msra.mxu0 0
  %121 = vmatprep.subr.bf16.mxu0 0
  %122 = vmatpush1.bf16.msra.mxu0 0
  %123 = vmatprep.subr.bf16.mxu0 0
  %124 = vmatpush1.bf16.msra.mxu0 0
  %125 = vmatprep.subr.bf16.mxu0 0
  %126 = vmatpush1.bf16.msra.mxu0 %v108
  %127 = vmatprep.subr.bf16.mxu0 0
  %128 = vmatpush1.bf16.msra.mxu0 %v107
  %129 = vmatprep.subr.bf16.mxu0 0
  %130 = vmatpush1.bf16.msra.mxu0 %v106
  %131 = vmatprep.subr.bf16.mxu0 0
  %132 = vmatpush1.bf16.msra.mxu0 %v105
  %133 = vmatprep.subr.bf16.mxu0 0
  %134 = vmatpush2.bf16.msra.mxu0 0
  %135 = vmatprep.subr.bf16.mxu0 0
  %136 = vmatpush2.bf16.msra.mxu0 0
  %137 = vmatprep.subr.bf16.mxu0 0
  %138 = vmatpush2.bf16.msra.mxu0 0
  %139 = vmatprep.subr.bf16.mxu0 0
  %140 = vmatpush2.bf16.msra.mxu0 0
  %141 = vmatprep.subr.bf16.mxu0 0
  %142 = vmatpush2.bf16.msra.mxu0 0
  %143 = vmatprep.subr.bf16.mxu0 0
  %144 = vmatpush2.bf16.msra.mxu0 0
  %145 = vmatprep.subr.bf16.mxu0 0
  %146 = vmatpush2.bf16.msra.mxu0 0
  %147 = vmatprep.subr.bf16.mxu0 0
  %148 = vmatpush2.bf16.msra.mxu0 0
  %149 = vmatprep.mubr.bf16.mxu0 0
  %150 = vmatmul.mubr.bf16.gmra.mxu0 %v115
  %v151 = vpop.f32.mrf.mxu0
  %v152 = vadd.f32 %v87, %v151
  %v153 = vpop.f32.mrf.mxu0
  %v154 = vpop.f32.mrf.mxu0
  %v155 = vpop.f32.mrf.mxu0
  %156 = vdwg.mxu0
  %v157 = vtanh.pop %v152
  %v158 = vld [vmem:[%s1 + $0x30] sm:$0xf]
  %v159 = vld [vmem:[%s1 + $0x34] sm:$0xf]
  %v160 = vld [vmem:[%s1 + $0x38] sm:$0xf]
  %v161 = vld [vmem:[%s1 + $0x3c] sm:$0xf]
  %v162 = vld [vmem:[%s1 + $0x40] sm:$0xf]
  %v163 = vld [vmem:[%s1 + $0x44] sm:$0xf]
  %v164 = vld [vmem:[%s1 + $0x48] sm:$0xf]
  %v165 = vld [vmem:[%s1 + $0x4c] sm:$0xf]
  %v166 = vld [vmem:[%s2 + $0x10] sm:$0xff]
  %v167 = vpack.c.bf16 %v157, %v157
  %v176 = vunpack.c.l.b16 %v158
  %v177 = vunpack.c.l.b16 %v159
  %v178 = vunpack.c.l.b16 %v160
  %v179 = vunpack.c.l.b16 %v161
  %v180 = vunpack.c.l.b16 %v162
  %v181 = vunpack.c.l.b16 %v163
  %v182 = vunpack.c.l.b16 %v164
  %v183 = vunpack.c.l.b16 %v165
  %v184 = vpack.c.b16 %v177, %v176
  %v185 = vpack.c.b16 %v179, %v178
  %v186 = vpack.c.b16 %v181, %v180
  %v187 = vpack.c.b16 %v183, %v182
  %v193 = vsel %vm113, %v167, 0
  %195 = vmatprep.subr.bf16.mxu0 0
  %196 = vmatpush1.bf16.msra.mxu0 0
  %197 = vmatprep.subr.bf16.mxu0 0
  %198 = vmatpush1.bf16.msra.mxu0 0
  %199 = vmatprep.subr.bf16.mxu0 0
  %200 = vmatpush1.bf16.msra.mxu0 0
  %201 = vmatprep.subr.bf16.mxu0 0
  %202 = vmatpush1.bf16.msra.mxu0 0
  %203 = vmatprep.subr.bf16.mxu0 0
  %204 = vmatpush1.bf16.msra.mxu0 %v187
  %205 = vmatprep.subr.bf16.mxu0 0
  %206 = vmatpush1.bf16.msra.mxu0 %v186
  %207 = vmatprep.subr.bf16.mxu0 0
  %208 = vmatpush1.bf16.msra.mxu0 %v185
  %209 = vmatprep.subr.bf16.mxu0 0
  %210 = vmatpush1.bf16.msra.mxu0 %v184
  %211 = vmatprep.subr.bf16.mxu0 0
  %212 = vmatpush2.bf16.msra.mxu0 0
  %213 = vmatprep.subr.bf16.mxu0 0
  %214 = vmatpush2.bf16.msra.mxu0 0
  %215 = vmatprep.subr.bf16.mxu0 0
  %216 = vmatpush2.bf16.msra.mxu0 0
  %217 = vmatprep.subr.bf16.mxu0 0
  %218 = vmatpush2.bf16.msra.mxu0 0
  %219 = vmatprep.subr.bf16.mxu0 0
  %220 = vmatpush2.bf16.msra.mxu0 0
  %221 = vmatprep.subr.bf16.mxu0 0
  %222 = vmatpush2.bf16.msra.mxu0 0
  %223 = vmatprep.subr.bf16.mxu0 0
  %224 = vmatpush2.bf16.msra.mxu0 0
  %225 = vmatprep.subr.bf16.mxu0 0
  %226 = vmatpush2.bf16.msra.mxu0 0
  %227 = vmatprep.mubr.bf16.mxu0 0
  %228 = vmatmul.mubr.bf16.gmra.mxu0 %v193
  %v229 = vpop.f32.mrf.mxu0
  %v230 = vadd.f32 %v166, %v229
  %v231 = vpop.f32.mrf.mxu0
  %v232 = vpop.f32.mrf.mxu0
  %v233 = vpop.f32.mrf.mxu0
  %234 = vdwg.mxu0
  %vm235 = vcmask 31744
  %236 = vst.msk [vmem:[%s3] sm:$0xff] %vm235, %v230
  // Predicated region
  $region14: #{policy_model_forward.1} parent=0 // pred_check
    _
  $region15: #{policy_model_forward.1} parent=0 // pred_check_branch
    %238 = sbr.rel (0) target = $region17
  $region16: #{policy_model_forward.1} parent=0 // pred_region
    _
  $region17: #{policy_model_forward.1} parent=0 // pred_fallthru
    _
  // Predicated region
  $region18: #{policy_model_forward.1} parent=0 // pred_check
    _
  $region19: #{policy_model_forward.1} parent=0 // pred_check_branch
    %240 = sbr.rel (0) target = $region21
  $region20: #{policy_model_forward.1} parent=0 // pred_region
    _
  $region21: #{policy_model_forward.1} parent=0 // pred_fallthru
    _

</llo_original>
